<compile_context>
chip_gen: v6e
topology: v6e:2x2x1
jax: 0.10.0
libtpu: 0.0.40
codegen_flags: <defaults>
</compile_context>

<pallas_src>
import functools

import jax
import jax.numpy as jnp
from jax.experimental import pallas as pl
from jax.experimental.pallas import tpu as pltpu


def power_norm_kernel(x_ref, o_ref, *, alpha, eps, valid_f):
    # Elementwise path stays in the input dtype (no forced f32 upcast for
    # narrow dtypes -> lower vreg pressure); the row sum accumulates in f32.
    x = x_ref[...]
    x = jnp.maximum(x, 0.0) + eps            # relu(x) + eps  (already >= eps)
    x = jnp.minimum(x, 1.0e6)                # clamp(max=1e6); lower clamp redundant

    alpha_f = float(alpha)
    if alpha_f == 1.0:
        pass
    elif alpha_f == 0.5:
        x = jnp.sqrt(x)                      # EUP sqrt, one pass
    elif alpha_f == 2.0:
        x = x * x                            # pure VALU
    elif alpha_f.is_integer() and 2.0 < alpha_f <= 4.0:
        p = x
        for _ in range(int(alpha_f) - 1):    # small integer power on VALU
            p = p * x
        x = p
    else:
        # x > 0 here, so exp(alpha*log(x)) is safe; single upcast to f32 so the
        # two transcendentals run once per element on the EUP even for bf16.
        x = jnp.exp(alpha_f * jnp.log(x.astype(jnp.float32))).astype(x.dtype)

    # Mask padded lanes out of the sum (padded lanes would otherwise be
    # eps**alpha after relu+eps and inflate every row's denominator).
    f_tile = x.shape[-1]
    if valid_f < f_tile:
        lane = jax.lax.broadcasted_iota(jnp.int32, x.shape, x.ndim - 1)
        x = jnp.where(lane < valid_f, x, 0.0)   # also zeroes padded output lanes

    s = jnp.sum(x, axis=-1, keepdims=True, dtype=jnp.float32) + eps
    inv = pl.reciprocal(s, approx=True)      # EUP vrcp (own VLIW slot, ~free)
    inv = inv * (2.0 - s * inv)              # one Newton step -> ~f32 accuracy
    o_ref[...] = (x * inv).astype(o_ref.dtype)


def _vmem_capacity_bytes():
    """Physical per-TensorCore VMEM; falls back to 128 MiB if the query fails."""
    try:
        return int(pltpu.get_tpu_info().vmem_capacity_bytes)
    except Exception:  # e.g. interpret mode / non-TPU tracing context
        return 128 * 1024 * 1024


def _pick_block_rows(B, F_pad, dtype, vmem_budget_bytes):
    """Largest sublane-rounded row tile whose double-buffered in+out footprint
    (computed on the *padded* lane width) fits the budget, while guaranteeing
    at least 2 grid steps so both v7x TensorCores get work."""
    itemsize = jnp.dtype(dtype).itemsize
    sublane = max(8, 32 // itemsize)               # 8 (f32), 16 (bf16), 32 (8-bit)
    # input + output tiles, each double-buffered by the pipeline -> 4 copies.
    rows = vmem_budget_bytes // max(1, 4 * F_pad * itemsize)
    rows = max(sublane, (rows // sublane) * sublane)
    rows = min(rows, 2048)
    # Cap at sublane-rounded cdiv(B, 2): >= 2 (and even) grid steps whenever
    # B is large enough to split, so the "parallel" axis shards across 2 TCs.
    half = ((pl.cdiv(B, 2) + sublane - 1) // sublane) * sublane
    rows = min(rows, max(sublane, half))
    return rows


def power_normalization(x, *, alpha=0.5, eps=1e-6, block_rows=None):
    """x: (batch, features). PowerNormalization forward along axis 1."""
    B, F = x.shape
    itemsize = jnp.dtype(x.dtype).itemsize

    # --- lane density: pad the feature axis up to a multiple of 128 ----------
    F_pad = pl.cdiv(F, 128) * 128
    x_in = x if F_pad == F else jnp.pad(x, ((0, 0), (0, F_pad - F)))
    # TODO(synk): for production shapes prefer a caller layout with F already a
    # multiple of 128 so the wrapper pad/slice copies disappear entirely.

    # --- generation-aware VMEM budget ----------------------------------------
    vmem_cap = _vmem_capacity_bytes()
    if vmem_cap >= 96 * 1024 * 1024:           # v5e / v6e: 128 MiB per TC
        budget = 56 * 1024 * 1024
        limit_cap = 96 * 1024 * 1024
    else:                                      # v7x: 64 MiB per TC
        budget = 24 * 1024 * 1024
        limit_cap = 48 * 1024 * 1024

    if block_rows is None:
        block_rows = _pick_block_rows(B, F_pad, x.dtype, budget)

    # Double-buffered input + output footprint on the PADDED tile shape.
    footprint = 4 * block_rows * F_pad * itemsize
    vmem_limit = int(min(limit_cap, max(16 * 1024 * 1024, 2 * footprint)))

    # --- cost estimate so XLA schedules the call with its true HBM cost ------
    alpha_f = float(alpha)
    if alpha_f == 1.0 or alpha_f.is_integer():
        trans_per_elem = 0
    elif alpha_f == 0.5:
        trans_per_elem = 1
    else:
        trans_per_elem = 2                     # log + exp
    cost = pl.CostEstimate(
        flops=6 * B * F,
        transcendentals=B * F * trans_per_elem + B,   # + per-row reciprocal
        bytes_accessed=2 * B * F * itemsize,
    )

    grid = (pl.cdiv(B, block_rows),)
    kernel = functools.partial(power_norm_kernel, alpha=alpha, eps=eps, valid_f=F)
    out = pl.pallas_call(
        kernel,
        out_shape=jax.ShapeDtypeStruct((B, F_pad), x.dtype),
        grid_spec=pltpu.PrefetchScalarGridSpec(
            num_scalar_prefetch=0,
            grid=grid,
            # NOTE: pipeline_mode=pl.Buffered(3) on the input is an optional
            # v7x sweep; keep the default double-buffering unless it measures.
            in_specs=[pl.BlockSpec((block_rows, F_pad), lambda i: (i, 0))],
            out_specs=pl.BlockSpec((block_rows, F_pad), lambda i: (i, 0)),
        ),
        compiler_params=pltpu.CompilerParams(
            dimension_semantics=("parallel",),
            vmem_limit_bytes=vmem_limit,
        ),
        cost_estimate=cost,
    )(x_in)

    return out if F_pad == F else out[:, :F]


if __name__ == "__main__":
    key = jax.random.PRNGKey(0)
    B, F = 64, 32                      # small MLP-style activation tensor
    alpha, eps = 0.5, 1e-6
    x = jax.random.normal(key, (B, F), dtype=jnp.float32) * 2.0

    out = jax.block_until_ready(power_normalization(x, alpha=alpha, eps=eps))

    # Reference check in plain JAX (matches the PyTorch forward).
    ref_x = jnp.clip(jnp.maximum(x, 0.0) + eps, eps, 1.0e6) ** alpha
    ref = ref_x / (jnp.sum(ref_x, axis=1, keepdims=True) + eps)

    assert out.shape == x.shape and out.dtype == x.dtype
    assert jnp.allclose(out, ref, atol=1e-5, rtol=1e-5)
    assert jnp.allclose(jnp.sum(out, axis=1), 1.0, atol=1e-5)

    print("KERNEL_OK")
</pallas_src>

<mosaic_0001>
module attributes {stable_mosaic.version = 11 : i64} {
  func.func @power_norm_kernel(%arg0: i32, %arg1: memref<32x128xf32, #tpu.memory_space<vmem>>, %arg2: memref<32x128xf32, #tpu.memory_space<vmem>>) attributes {dimension_semantics = [#tpu.dimension_semantics<parallel>], iteration_bounds = array<i64: 2>, scalar_prefetch = 0 : i64, scratch_operands = 0 : i64, tpu.core_type = #tpu.core_type<tc>, window_params = [{transform_indices = @transform_0, window_bounds = array<i64: 32, 128>}, {transform_indices = @transform_1, window_bounds = array<i64: 32, 128>}]} {
    %c0 = arith.constant 0 : index
    %c0_0 = arith.constant 0 : index
    %0 = vector.load %arg1[%c0, %c0_0] : memref<32x128xf32, #tpu.memory_space<vmem>>, vector<32x128xf32>
    %cst = arith.constant 0.000000e+00 : f32
    %1 = vector.broadcast %cst : f32 to vector<32x128xf32>
    %2 = arith.maximumf %0, %1 : vector<32x128xf32>
    %cst_1 = arith.constant 9.99999997E-7 : f32
    %3 = vector.broadcast %cst_1 : f32 to vector<32x128xf32>
    %4 = arith.addf %2, %3 : vector<32x128xf32>
    %cst_2 = arith.constant 1.000000e+06 : f32
    %5 = vector.broadcast %cst_2 : f32 to vector<32x128xf32>
    %6 = arith.minimumf %4, %5 : vector<32x128xf32>
    %7 = math.sqrt %6 : vector<32x128xf32>
    %8 = tpu.iota {dimensions = array<i32: 1>} : vector<32x128xi32>
    %c32_i32 = arith.constant 32 : i32
    %9 = vector.broadcast %c32_i32 : i32 to vector<32x128xi32>
    %10 = arith.cmpi slt, %8, %9 : vector<32x128xi32>
    %cst_3 = arith.constant 0.000000e+00 : f32
    %11 = vector.broadcast %cst_3 : f32 to vector<32x128xf32>
    %12 = arith.select %10, %7, %11 : vector<32x128xi1>, vector<32x128xf32>
    %cst_4 = arith.constant dense<0.000000e+00> : vector<32xf32>
    %13 = vector.multi_reduction <add>, %12, %cst_4 [1] : vector<32x128xf32> to vector<32xf32>
    %14 = vector.shape_cast %13 : vector<32xf32> to vector<32x1xf32>
    %cst_5 = arith.constant 9.99999997E-7 : f32
    %15 = vector.broadcast %cst_5 : f32 to vector<32x1xf32>
    %16 = arith.addf %14, %15 : vector<32x1xf32>
    %17 = tpu.reciprocal %16 {approx = true} : vector<32x1xf32> -> vector<32x1xf32>
    %18 = arith.mulf %16, %17 : vector<32x1xf32>
    %cst_6 = arith.constant 2.000000e+00 : f32
    %19 = vector.broadcast %cst_6 : f32 to vector<32x1xf32>
    %20 = arith.subf %19, %18 : vector<32x1xf32>
    %21 = arith.mulf %17, %20 : vector<32x1xf32>
    %22 = vector.broadcast %21 : vector<32x1xf32> to vector<32x128xf32>
    %23 = arith.mulf %12, %22 : vector<32x128xf32>
    %c0_7 = arith.constant 0 : index
    %c0_8 = arith.constant 0 : index
    %24 = vector.load %arg2[%c0_7, %c0_8] : memref<32x128xf32, #tpu.memory_space<vmem>>, vector<32x128xf32>
    tpu.vector_store %arg2[%c0_7, %c0_8], %23 {strides = array<i32>} : memref<32x128xf32, #tpu.memory_space<vmem>>, vector<32x128xf32>,
    return
  }
  func.func @transform_0(%arg0: i32) -> (i32, i32) {
    %c0_i32 = arith.constant 0 : i32
    %c0_i32_0 = arith.constant 0 : i32
    return %arg0, %c0_i32 : i32, i32
  }
  func.func @transform_1(%arg0: i32) -> (i32, i32) {
    %c0_i32 = arith.constant 0 : i32
    %c0_i32_0 = arith.constant 0 : i32
    return %arg0, %c0_i32 : i32, i32
  }
}

</mosaic_0001>

<llo_original>
// kernel: tpu_custom_call.1
$region0: #{tpu_custom_call.1}
  #allocation0 [shape = 'u32[]', space=smem, size = 0x4, offset = 0x4, fixed_abs, tag = 'smem constant byte address 0x4 - core index']
  #allocation1 [shape = 'u32[144,128]{1,0:T(1,128)}', space=vmem, size = 0x12000, scoped, tag = 'internal scratch']
  %s0 = inlined_call_operand.hbm [shape: f32[64,128], index: 0, kind: input, shape index: {}]
  %s1 = inlined_call_operand.hbm [shape: f32[64,128], index: 1, kind: output, shape index: {}]
  %s2 = sld [smem:[#allocation0]]
  $region41: #{tpu_custom_call.1} parent=0
    _
  %s4 = ssub.s32 1, %s2
  %s5 = scalar_select 0, %s4, %s2
  $region1: #{tpu_custom_call.1} parent=0
    #allocation2 [shape = 'u8[32768]{0}', space=vmem, size = 0x8000, scoped, tag = 'input window, operand 0']
    #allocation3 [shape = 's32[2]{0}', space=sflag, size = 0x8, scoped, tag = 'scoped memory for tpu_custom_call.1']
    #allocation4 [shape = 's32[2]{0}', space=sflag, size = 0x8, scoped, tag = 'scoped memory for tpu_custom_call.1']
    #allocation5 [shape = 'u8[32768]{0}', space=vmem, size = 0x8000, scoped, tag = 'output window, operand 0']
    %6 = vsyncpa [#allocation3], 0
    %s7 = scalar_lea.sflag [#allocation3], 1
    %8 = vsyncpa %s7, 0
    %9 = vsyncpa [#allocation4], 0
    %s10 = scalar_lea.sflag [#allocation4], 1
    %11 = vsyncpa %s10, 0
    loop: start=0, step=1, limit=4
    $region2: #{tpu_custom_call.1} parent=1 // loop_pre_header
      _
    $region3: #{tpu_custom_call.1} parent=1 // loop_header
      %s13 = sphi 0, %s17
      %p14 = scmp.ge.s32.totalorder %s13, 4
      %s23 = sphi 0, %s25
      %s26 = sphi 0, %s23
      %s27 = sphi 0, %s26
      %s43 = sphi 0, %s27
      %s49 = sphi 0, %s51
      %s52 = sphi 0, %s49
      %s53 = sphi 0, %s52
      %s69 = sphi 0, %s53
    $region4: #{tpu_custom_call.1} parent=1 // loop_header_branch
      %16 = sbr.rel (%p14) target = $region8
    $region5: #{tpu_custom_call.1} parent=1 // loop_body
      %s18 = ssub.s32 %s13, 1
      %s19 = ssub.s32 %s13, 2
      %s20 = sadd.s32 %s13, 1
      %s21 = ssub.s32 %s13, %s20
      %p22 = scmp.eq.s32.totalorder %s21, 0
      %s24 = sadd.s32 %s23, 1
      %s25 = scalar_select %p22, %s23, %s24
      %p28 = pneg %p22
      %p29 = scmp.eq.s32.totalorder %s13, 1
      %p30 = por %p28, %p29
      %p31 = scmp.ne.s32.totalorder %s23, %s26
      %p32 = scmp.eq.s32.totalorder %s13, 0
      %p33 = por %p31, %p32
      %p34 = scmp.ne.s32.totalorder %s23, %s26
      %p35 = scmp.eq.s32.totalorder %s18, 1
      %p36 = por %p34, %p35
      %p37 = scmp.ne.s32.totalorder %s26, %s27
      %p38 = scmp.eq.s32.totalorder %s18, 0
      %p39 = por %p37, %p38
      %p40 = scmp.ne.s32.totalorder %s26, %s27
      %p41 = scmp.eq.s32.totalorder %s19, 1
      %p42 = por %p40, %p41
      %p44 = scmp.ne.s32.totalorder %s27, %s43
      %p45 = scmp.eq.s32.totalorder %s19, 0
      %p46 = por %p44, %p45
      %s47 = ssub.s32 %s13, %s20
      %p48 = scmp.eq.s32.totalorder %s47, 0
      %s50 = sadd.s32 %s49, 1
      %s51 = scalar_select %p48, %s49, %s50
      %p54 = pneg %p48
      %p55 = scmp.eq.s32.totalorder %s13, 1
      %p56 = por %p54, %p55
      %p57 = scmp.ne.s32.totalorder %s49, %s52
      %p58 = scmp.eq.s32.totalorder %s13, 0
      %p59 = por %p57, %p58
      %p60 = scmp.ne.s32.totalorder %s49, %s52
      %p61 = scmp.eq.s32.totalorder %s18, 1
      %p62 = por %p60, %p61
      %p63 = scmp.ne.s32.totalorder %s52, %s53
      %p64 = scmp.eq.s32.totalorder %s18, 0
      %p65 = por %p63, %p64
      %p66 = scmp.ne.s32.totalorder %s52, %s53
      %p67 = scmp.eq.s32.totalorder %s19, 1
      %p68 = por %p66, %p67
      %p70 = scmp.ne.s32.totalorder %s53, %s69
      %p71 = scmp.eq.s32.totalorder %s19, 0
      %p72 = por %p70, %p71
      %p73 = scmp.le.s32.totalorder 1, %s13
      %p74 = scmp.lt.s32.totalorder %s13, 3
      %p75 = pnand %p73, %p74
      %p76 = pneg %p75
      // Predicated region
      $region9: #{tpu_custom_call.1} parent=5 // pred_check
        _
      $region10: #{tpu_custom_call.1} parent=5 // pred_check_branch
        %78 = sbr.rel (%p75) target = $region12
      $region11: #{tpu_custom_call.1} parent=5 // pred_region
        %s79 = ssub.s32 %s13, 1
      $region12: #{tpu_custom_call.1} parent=5 // pred_fallthru
        _
      %p80 = scmp.lt.s32.totalorder %s13, 2
      // Predicated region
      $region13: #{tpu_custom_call.1} parent=5 // pred_check
        %p81 = pneg %p80
      $region14: #{tpu_custom_call.1} parent=5 // pred_check_branch
        %83 = sbr.rel (%p81) target = $region16
      $region15: #{tpu_custom_call.1} parent=5 // pred_region
        // Predicated region
        $region17: #{tpu_custom_call.1} parent=15 // pred_check
          %p84 = pneg %p33
        $region18: #{tpu_custom_call.1} parent=15 // pred_check_branch
          %86 = sbr.rel (%p84) target = $region20
        $region19: #{tpu_custom_call.1} parent=15 // pred_region
          %s87 = sand.u32 %s23, 1
          %s88 = scalar_lea.sflag [#allocation3], %s87
          %s89 = sand.u32 %s23, 1
          %s90 = smul.addr %s89, 32
          %s91 = scalar_lea.vmem [#allocation2], %s90
          %s92 = smul.u32 4, %s13
          %s94 = ssub.s32 512, 512
          %95 = vsyncadd %s88, %s94
          %s96 = smul.addr %s92, 128
          %s97 = scalar_lea.hbm %s0, %s96
          %s98 = sshll.u32 %s91, 4
          %s99 = int_to_ptr.vmem [resolvable:$true] %s98
          %104 = dma.hbm_to_vmem [thread:$0]  %s97, 512, %s99, %s88, 128, 128, 8
        $region20: #{tpu_custom_call.1} parent=15 // pred_fallthru
          _
      $region16: #{tpu_custom_call.1} parent=5 // pred_fallthru
        _
      %p105 = scmp.le.s32.totalorder 1, %s13
      %p106 = scmp.lt.s32.totalorder %s13, 3
      %p107 = pnand %p105, %p106
      %p108 = pneg %p107
      // Predicated region
      $region21: #{tpu_custom_call.1} parent=5 // pred_check
        _
      $region22: #{tpu_custom_call.1} parent=5 // pred_check_branch
        %110 = sbr.rel (%p107) target = $region24
      $region23: #{tpu_custom_call.1} parent=5 // pred_region
        %s111 = ssub.s32 %s13, 1
        %s112 = sand.u32 %s26, 1
        %s113 = scalar_lea.sflag [#allocation3], %s112
        %s114 = sand.u32 %s26, 1
        %s115 = smul.addr %s114, 32
        %s116 = scalar_lea.vmem [#allocation2], %s115
        // Predicated region
        $region25: #{tpu_custom_call.1} parent=23 // pred_check
          %p117 = pneg %p39
        $region26: #{tpu_custom_call.1} parent=23 // pred_check_branch
          %119 = sbr.rel (%p117) target = $region28
        $region27: #{tpu_custom_call.1} parent=23 // pred_region
          %120 = dma.done %s113, 512
        $region28: #{tpu_custom_call.1} parent=23 // pred_fallthru
          _
        %s121 = sand.u32 %s26, 1
        %s122 = scalar_lea.sflag [#allocation3], %s121
        %s123 = sand.u32 %s26, 1
        %s124 = smul.addr %s123, 32
        %s125 = scalar_lea.vmem [#allocation2], %s124
        %p126 = pneg %p39
        %p127 = pneg %p36
        %p128 = pneg %p65
        %p129 = pneg %p62
        %s130 = sand.u32 %s52, 1
        %s131 = scalar_lea.sflag [#allocation4], %s130
        %s132 = sand.u32 %s52, 1
        %s133 = smul.addr %s132, 32
        %s134 = scalar_lea.vmem [#allocation5], %s133
        %s135 = smul.u32 4, %s18
        %s136 = smul.u32 4, %s18
        %v137 = vld [vmem:[%s116] sm:$0xff]
        %v138 = vld [vmem:[%s116 + $0x8] sm:$0xff]
        %v139 = vld [vmem:[%s116 + $0x10] sm:$0xff]
        %v140 = vld [vmem:[%s116 + $0x18] sm:$0xff]
        %v141 = vmax.f32 %v137, 0.0
        %v142 = vmax.f32 %v138, 0.0
        %v143 = vmax.f32 %v139, 0.0
        %v144 = vmax.f32 %v140, 0.0
        %v145 = vadd.f32 %v141, 1e-06
        %v146 = vadd.f32 %v142, 1e-06
        %v147 = vadd.f32 %v143, 1e-06
        %v148 = vadd.f32 %v144, 1e-06
        %v149 = vmin.f32 %v145, 1000000.0
        %v150 = vmin.f32 %v146, 1000000.0
        %v151 = vmin.f32 %v147, 1000000.0
        %v152 = vmin.f32 %v148, 1000000.0
        %v153 = vrsqrt.pop %v149
        %v154 = vmul.f32 %v149, %v153
        %vm155 = vcmp.eq.f32.partialorder %v149, inf
        %v156 = vsel %vm155, %v149, %v154
        %vm157 = vcmp.eq.f32.partialorder %v149, 0.0
        %v158 = vand.u32 %v149, 2147483648
        %v159 = vsel %vm157, %v158, %v156
        %v160 = vrsqrt.pop %v150
        %v161 = vmul.f32 %v150, %v160
        %vm162 = vcmp.eq.f32.partialorder %v150, inf
        %v163 = vsel %vm162, %v150, %v161
        %vm164 = vcmp.eq.f32.partialorder %v150, 0.0
        %v165 = vand.u32 %v150, 2147483648
        %v166 = vsel %vm164, %v165, %v163
        %v167 = vrsqrt.pop %v151
        %v168 = vmul.f32 %v151, %v167
        %vm169 = vcmp.eq.f32.partialorder %v151, inf
        %v170 = vsel %vm169, %v151, %v168
        %vm171 = vcmp.eq.f32.partialorder %v151, 0.0
        %v172 = vand.u32 %v151, 2147483648
        %v173 = vsel %vm171, %v172, %v170
        %v174 = vrsqrt.pop %v152
        %v175 = vmul.f32 %v152, %v174
        %vm176 = vcmp.eq.f32.partialorder %v152, inf
        %v177 = vsel %vm176, %v152, %v175
        %vm178 = vcmp.eq.f32.partialorder %v152, 0.0
        %v179 = vand.u32 %v152, 2147483648
        %v180 = vsel %vm178, %v179, %v177
        %v181 = vlaneseq
        %v182 = vand.u32 %v181, 127
        %vm183 = vcmp.lt.s32.totalorder %v182, 32
        %v184 = vsel %vm183, %v159, 0.0
        %v185 = vsel %vm183, %v166, 0.0
        %v186 = vsel %vm183, %v173, 0.0
        %v187 = vsel %vm183, %v180, 0.0
        %188 = vadd.xlane.f32.xlu0 %v184
        %v189 = vpop.xlane.xlu0 %188
        %190 = vadd.xlane.f32.xlu0 %v185
        %v191 = vpop.xlane.xlu0 %190
        %192 = vadd.xlane.f32.xlu0 %v186
        %v193 = vpop.xlane.xlu0 %192
        %194 = vadd.xlane.f32.xlu0 %v187
        %v195 = vpop.xlane.xlu0 %194
        %v196 = vadd.f32 %v189, 1e-06
        %v197 = vadd.f32 %v191, 1e-06
        %v198 = vadd.f32 %v193, 1e-06
        %v199 = vadd.f32 %v195, 1e-06
        %v200 = vrcp.pop %v196
        %v201 = vrcp.pop %v197
        %v202 = vrcp.pop %v198
        %v203 = vrcp.pop %v199
        %v204 = vmul.f32 %v196, %v200
        %v205 = vmul.f32 %v197, %v201
        %v206 = vmul.f32 %v198, %v202
        %v207 = vmul.f32 %v199, %v203
        %v208 = vsub.f32 2.0, %v204
        %v209 = vsub.f32 2.0, %v205
        %v210 = vsub.f32 2.0, %v206
        %v211 = vsub.f32 2.0, %v207
        %v212 = vmul.f32 %v200, %v208
        %v213 = vmul.f32 %v201, %v209
        %v214 = vmul.f32 %v202, %v210
        %v215 = vmul.f32 %v203, %v211
        %v216 = vmul.f32 %v184, %v212
        %v217 = vmul.f32 %v185, %v213
        %v218 = vmul.f32 %v186, %v214
        %v219 = vmul.f32 %v187, %v215
        %220 = vst [vmem:[%s134] sm:$0xff] %v216
        %221 = vst [vmem:[%s134 + $0x8] sm:$0xff] %v217
        %222 = vst [vmem:[%s134 + $0x10] sm:$0xff] %v218
        %223 = vst [vmem:[%s134 + $0x18] sm:$0xff] %v219
        %s224 = sand.u32 %s52, 1
        %s225 = scalar_lea.sflag [#allocation4], %s224
        %s226 = sand.u32 %s52, 1
        %s227 = smul.addr %s226, 32
        %s228 = scalar_lea.vmem [#allocation5], %s227
        // Predicated region
        $region29: #{tpu_custom_call.1} parent=23 // pred_check
          %p229 = pneg %p62
        $region30: #{tpu_custom_call.1} parent=23 // pred_check_branch
          %231 = sbr.rel (%p229) target = $region32
        $region31: #{tpu_custom_call.1} parent=23 // pred_region
          %s232 = smul.u32 4, %s18
          %s234 = ssub.s32 512, 512
          %235 = vsyncadd %s225, %s234
          %s236 = smul.addr %s232, 128
          %s237 = scalar_lea.hbm %s1, %s236
          %s238 = sshll.u32 %s228, 4
          %s239 = int_to_ptr.vmem [resolvable:$true] %s238
          %244 = dma.vmem_to_hbm [thread:$0]  %s239, 512, %s237, %s225, 128, 128, 8
        $region32: #{tpu_custom_call.1} parent=23 // pred_fallthru
          _
      $region24: #{tpu_custom_call.1} parent=5 // pred_fallthru
        _
      %p245 = scmp.le.s32.totalorder 2, %s13
      // Predicated region
      $region33: #{tpu_custom_call.1} parent=5 // pred_check
        %p246 = pneg %p245
      $region34: #{tpu_custom_call.1} parent=5 // pred_check_branch
        %248 = sbr.rel (%p246) target = $region36
      $region35: #{tpu_custom_call.1} parent=5 // pred_region
        %s249 = ssub.s32 %s13, 2
        // Predicated region
        $region37: #{tpu_custom_call.1} parent=35 // pred_check
          %p250 = pneg %p68
        $region38: #{tpu_custom_call.1} parent=35 // pred_check_branch
          %252 = sbr.rel (%p250) target = $region40
        $region39: #{tpu_custom_call.1} parent=35 // pred_region
          %s253 = sand.u32 %s53, 1
          %s254 = scalar_lea.sflag [#allocation4], %s253
          %s255 = sand.u32 %s53, 1
          %s256 = smul.addr %s255, 32
          %s257 = scalar_lea.vmem [#allocation5], %s256
          %258 = dma.done %s254, 512
        $region40: #{tpu_custom_call.1} parent=35 // pred_fallthru
          _
      $region36: #{tpu_custom_call.1} parent=5 // pred_fallthru
        _
    $region6: #{tpu_custom_call.1} parent=1 // loop_footer
      %s17 = sadd.s32 1, %s13
    $region7: #{tpu_custom_call.1} parent=1 // loop_footer_branch
      %12 = sbr.rel target = $region3
    $region8: #{tpu_custom_call.1} parent=1 // loop_exit
      _
    %259 = vsyncpa [#allocation3], 1
    %s260 = scalar_lea.sflag [#allocation3], 1
    %261 = vsyncpa %s260, 1
    %262 = vsyncpa [#allocation4], 1
    %s263 = scalar_lea.sflag [#allocation4], 1
    %264 = vsyncpa %s263, 1

</llo_original>
